<compile_context>
chip_gen: v5e
topology: v5e:2x2
jax: 0.10.0
libtpu: 0.0.40
codegen_flags: <defaults>
</compile_context>

<pallas_src>
import functools

import jax
import jax.numpy as jnp
from jax import lax
from jax.experimental import pallas as pl
from jax.experimental.pallas import tpu as pltpu


def _round_up(x, m):
    return ((x + m - 1) // m) * m


def _hybrid_loss_kernel(logits_ref, tgt_ref, w_ref, out_ref,
                        m_acc, l_acc, tl_acc, wi_acc,
                        *, n_rows, n_classes):
    # logits_ref : (tile_n, tile_c) native dtype, VMEM
    # tgt_ref    : (tile_n, 1) int32, VMEM
    # w_ref      : (1, tile_c) f32, VMEM (class-weight slice)
    # out_ref    : (1, 3) f32, SMEM  -> [sum(w_i*ce_i), sum(w_i), sum(focal_i)] per row tile
    # m/l/tl/wi  : (tile_n, 1) f32 VMEM scratch (online-logsumexp + gather accumulators)
    i = pl.program_id(0)                 # row-tile index (parallel)
    j = pl.program_id(1)                 # class-tile index (arbitrary, innermost)
    n_ctiles = pl.num_programs(1)

    tile_n, tile_c = logits_ref.shape

    @pl.when(j == 0)
    def _init():
        m_acc[...] = jnp.full_like(m_acc, -jnp.inf)
        l_acc[...] = jnp.zeros_like(l_acc)
        tl_acc[...] = jnp.zeros_like(tl_acc)
        wi_acc[...] = jnp.zeros_like(wi_acc)

    logits = logits_ref[...].astype(jnp.float32)              # (tile_n, tile_c)
    tgt = tgt_ref[...]                                          # (tile_n, 1) int32
    w = w_ref[...].astype(jnp.float32)                          # (1, tile_c)

    # Global class index of each column of this tile; mask columns that overhang C.
    col = lax.broadcasted_iota(jnp.int32, (tile_n, tile_c), 1) + j * tile_c
    col_ok = col < n_classes
    onehot = jnp.logical_and(col == tgt, col_ok)                # in-kernel one-hot (no HBM)

    # where-selects everywhere (never multiply garbage by 0 -> NaN).
    zlog = jnp.where(col_ok, logits, -jnp.inf)

    # Online (streaming) logsumexp across class tiles.
    m_old = m_acc[...]
    m_tile = jnp.max(zlog, axis=-1, keepdims=True)
    m_new = jnp.maximum(m_old, m_tile)
    l_acc[...] = (l_acc[...] * jnp.exp(m_old - m_new)
                  + jnp.sum(jnp.exp(zlog - m_new), axis=-1, keepdims=True))
    m_acc[...] = m_new

    # "Gathers" of the target logit / target class weight as masked lane reduces.
    tl_acc[...] += jnp.sum(jnp.where(onehot, logits, 0.0), axis=-1, keepdims=True)
    wi_acc[...] += jnp.sum(jnp.where(onehot, w, 0.0), axis=-1, keepdims=True)

    @pl.when(j == n_ctiles - 1)
    def _finalize():
        lse = m_acc[...] + jnp.log(l_acc[...])                  # (tile_n, 1)
        nll = lse - tl_acc[...]                                 # ce_i = -logp[i, t_i]
        # Mask rows of the (possibly partial) last row tile that lie past the true N.
        row = lax.broadcasted_iota(jnp.int32, (tile_n, 1), 0) + i * tile_n
        valid = row < n_rows
        nll_v = jnp.where(valid, nll, 0.0)
        wi_v = jnp.where(valid, wi_acc[...], 0.0)
        wnll = wi_v * nll_v                                     # w_{t_i} * ce_i
        pt = jnp.exp(-nll_v)
        one_m_pt = 1.0 - pt
        focal = one_m_pt * one_m_pt * wnll                      # (1-pt)^2 * ce_i * w_{t_i}
        out_ref[0, 0] = jnp.sum(wnll)
        out_ref[0, 1] = jnp.sum(wi_v)
        out_ref[0, 2] = jnp.sum(focal)


def _vmem_budget_bytes():
    # ~75% of physical per-TensorCore VMEM: ~48 MiB on v7x (64 MiB parts),
    # capped at ~96 MiB on v5e/v6e (128 MiB parts).  Leaves headroom for Mosaic
    # internal scratch and double-buffered small operands.
    try:
        cap = int(pltpu.get_tpu_info().vmem_capacity_bytes)
    except Exception:
        cap = 64 * 1024 * 1024          # v7x per-TC physical: conservative everywhere
    return min(cap * 3 // 4, 96 * 1024 * 1024)


def _choose_tiles(n, c, itemsize, budget, max_tile_n=1024):
    # Per logits element: 2x double-buffered native tile + ~4 f32 in-kernel temporaries.
    per_elem = 2 * itemsize + 16
    tn = max(8, min(_round_up(max(n, 1), 8), _round_up(max_tile_n, 8)))
    if tn * c * per_elem <= budget:
        return tn, c                     # single class tile (full-C blocks)
    # Split the class axis: TILE_C must be a multiple of 128 (lane tiling).
    tc = (budget // (tn * per_elem)) // 128 * 128
    while tc < 128 and tn > 128:
        tn = max(128, (tn // 2 // 8) * 8)
        tc = (budget // (tn * per_elem)) // 128 * 128
    tc = max(128, tc)
    tc = min(tc, _round_up(c, 128))
    return tn, tc


def hybrid_loss(logits, targets, class_weights, *, max_tile_n=1024):
    N, C = logits.shape
    itemsize = jnp.dtype(logits.dtype).itemsize
    budget = _vmem_budget_bytes()
    tn, tc = _choose_tiles(N, C, itemsize, budget, max_tile_n)
    n_row_tiles = pl.cdiv(N, tn)
    n_col_tiles = pl.cdiv(C, tc)

    # No padding of the big logits array: partial row/class blocks are masked in-kernel.
    tgt2d = targets.astype(jnp.int32).reshape(N, 1)
    w2d = class_weights.astype(jnp.float32).reshape(1, C)

    kernel = functools.partial(_hybrid_loss_kernel, n_rows=N, n_classes=C)

    cost = pl.CostEstimate(
        flops=8 * N * C,
        transcendentals=N * C + 3 * N,
        bytes_accessed=N * C * itemsize + N * 4 + C * 4 + n_row_tiles * 3 * 4,
    )

    partials = pl.pallas_call(
        kernel,
        out_shape=jax.ShapeDtypeStruct((n_row_tiles, 3), jnp.float32),
        grid=(n_row_tiles, n_col_tiles),
        in_specs=[
            pl.BlockSpec((tn, tc), lambda i, j: (i, j)),        # logits tile (native dtype)
            pl.BlockSpec((tn, 1), lambda i, j: (i, 0)),         # targets column
            pl.BlockSpec((1, tc), lambda i, j: (0, j)),         # class-weight slice
        ],
        out_specs=pl.BlockSpec((1, 3), lambda i, j: (i, 0),
                               memory_space=pltpu.MemorySpace.SMEM),
        scratch_shapes=[pltpu.VMEM((tn, 1), jnp.float32)] * 4,  # m, l, target-logit, w_i
        compiler_params=pltpu.CompilerParams(
            dimension_semantics=("parallel", "arbitrary"),
            vmem_limit_bytes=budget,
        ),
        cost_estimate=cost,
    )(logits, tgt2d, w2d)

    # Finalize in plain JAX (tiny reduce).
    sum_wnll = jnp.sum(partials[:, 0])
    sum_w = jnp.sum(partials[:, 1])
    sum_focal = jnp.sum(partials[:, 2])
    ce_loss = sum_wnll / sum_w           # nn.CrossEntropyLoss(weight=..., reduction='mean')
    focal_mean = sum_focal / N           # focal term is a plain mean over the batch
    return 0.7 * ce_loss + 0.3 * focal_mean


def hybrid_loss_ref(logits, targets, class_weights):
    # Pure-JAX reference mirroring the PyTorch semantics.
    logp = jax.nn.log_softmax(logits.astype(jnp.float32), axis=-1)
    nll = -jnp.take_along_axis(logp, targets[:, None], axis=-1)[:, 0]
    wi = class_weights[targets].astype(jnp.float32)
    ce_loss = jnp.sum(wi * nll) / jnp.sum(wi)
    pt = jnp.exp(-nll)
    focal = ((1.0 - pt) ** 2) * nll * wi
    return 0.7 * ce_loss + 0.3 * jnp.mean(focal)


if __name__ == "__main__":
    key = jax.random.PRNGKey(0)
    k_logits, k_tgt = jax.random.split(key)

    N, C = 10, 4                          # batch=10 (exercises ragged row tile), 4 classes
    logits = jax.random.normal(k_logits, (N, C), dtype=jnp.float32)
    targets = jax.random.randint(k_tgt, (N,), 0, C, dtype=jnp.int32)
    class_weights = jnp.array([1.0, 2.0, 0.5, 1.5], dtype=jnp.float32)

    loss = hybrid_loss(logits, targets, class_weights)
    loss = jax.block_until_ready(loss)

    ref = hybrid_loss_ref(logits, targets, class_weights)
    assert jnp.allclose(loss, ref, rtol=1e-5, atol=1e-5), (loss, ref)

    print("KERNEL_OK")
</pallas_src>

<mosaic_0001>
module attributes {stable_mosaic.version = 11 : i64} {
  func.func @_hybrid_loss_kernel(%arg0: i32, %arg1: i32, %arg2: memref<16x4xf32, #tpu.memory_space<vmem>>, %arg3: memref<16x1xi32, #tpu.memory_space<vmem>>, %arg4: memref<1x4xf32, #tpu.memory_space<vmem>>, %arg5: memref<1x3xf32, #tpu.memory_space<smem>>, %arg6: memref<16x1xf32, #tpu.memory_space<vmem>>, %arg7: memref<16x1xf32, #tpu.memory_space<vmem>>, %arg8: memref<16x1xf32, #tpu.memory_space<vmem>>, %arg9: memref<16x1xf32, #tpu.memory_space<vmem>>) attributes {dimension_semantics = [#tpu.dimension_semantics<parallel>, #tpu.dimension_semantics<arbitrary>], iteration_bounds = array<i64: 1, 1>, scalar_prefetch = 0 : i64, scratch_operands = 4 : i64, tpu.core_type = #tpu.core_type<tc>, window_params = [{transform_indices = @transform_0, window_bounds = array<i64: 16, 4>}, {transform_indices = @transform_1, window_bounds = array<i64: 16, 1>}, {transform_indices = @transform_2, window_bounds = array<i64: 1, 4>}, {transform_indices = @transform_3, window_bounds = array<i64: 1, 3>}]} {
    %c0_i32 = arith.constant 0 : i32
    %0 = arith.cmpi eq, %arg1, %c0_i32 : i32
    %1 = arith.extui %0 : i1 to i32
    %c0_i32_0 = arith.constant 0 : i32
    %2 = arith.cmpi ne, %1, %c0_i32_0 : i32
    scf.if %2 {
      %cst_31 = arith.constant 0xFF800000 : f32
      %52 = vector.broadcast %cst_31 : f32 to vector<16x1xf32>
      %c0_32 = arith.constant 0 : index
      %c0_33 = arith.constant 0 : index
      %53 = vector.load %arg6[%c0_32, %c0_33] : memref<16x1xf32, #tpu.memory_space<vmem>>, vector<16x1xf32>
      tpu.vector_store %arg6[%c0_32, %c0_33], %52 {strides = array<i32>} : memref<16x1xf32, #tpu.memory_space<vmem>>, vector<16x1xf32>,
      %cst_34 = arith.constant 0.000000e+00 : f32
      %54 = vector.broadcast %cst_34 : f32 to vector<16x1xf32>
      %c0_35 = arith.constant 0 : index
      %c0_36 = arith.constant 0 : index
      %55 = vector.load %arg7[%c0_35, %c0_36] : memref<16x1xf32, #tpu.memory_space<vmem>>, vector<16x1xf32>
      tpu.vector_store %arg7[%c0_35, %c0_36], %54 {strides = array<i32>} : memref<16x1xf32, #tpu.memory_space<vmem>>, vector<16x1xf32>,
      %cst_37 = arith.constant 0.000000e+00 : f32
      %56 = vector.broadcast %cst_37 : f32 to vector<16x1xf32>
      %c0_38 = arith.constant 0 : index
      %c0_39 = arith.constant 0 : index
      %57 = vector.load %arg8[%c0_38, %c0_39] : memref<16x1xf32, #tpu.memory_space<vmem>>, vector<16x1xf32>
      tpu.vector_store %arg8[%c0_38, %c0_39], %56 {strides = array<i32>} : memref<16x1xf32, #tpu.memory_space<vmem>>, vector<16x1xf32>,
      %cst_40 = arith.constant 0.000000e+00 : f32
      %58 = vector.broadcast %cst_40 : f32 to vector<16x1xf32>
      %c0_41 = arith.constant 0 : index
      %c0_42 = arith.constant 0 : index
      %59 = vector.load %arg9[%c0_41, %c0_42] : memref<16x1xf32, #tpu.memory_space<vmem>>, vector<16x1xf32>
      tpu.vector_store %arg9[%c0_41, %c0_42], %58 {strides = array<i32>} : memref<16x1xf32, #tpu.memory_space<vmem>>, vector<16x1xf32>,
    } else {
    }
    %c0 = arith.constant 0 : index
    %c0_1 = arith.constant 0 : index
    %3 = vector.load %arg2[%c0, %c0_1] : memref<16x4xf32, #tpu.memory_space<vmem>>, vector<16x4xf32>
    %c0_2 = arith.constant 0 : index
    %c0_3 = arith.constant 0 : index
    %4 = vector.load %arg3[%c0_2, %c0_3] : memref<16x1xi32, #tpu.memory_space<vmem>>, vector<16x1xi32>
    %c0_4 = arith.constant 0 : index
    %c0_5 = arith.constant 0 : index
    %5 = vector.load %arg4[%c0_4, %c0_5] : memref<1x4xf32, #tpu.memory_space<vmem>>, vector<1x4xf32>
    %6 = tpu.iota {dimensions = array<i32: 1>} : vector<16x4xi32>
    %c4_i32 = arith.constant 4 : i32
    %7 = arith.muli %arg1, %c4_i32 : i32
    %8 = vector.broadcast %7 : i32 to vector<16x4xi32>
    %9 = arith.addi %6, %8 : vector<16x4xi32>
    %c4_i32_6 = arith.constant 4 : i32
    %10 = vector.broadcast %c4_i32_6 : i32 to vector<16x4xi32>
    %11 = arith.cmpi slt, %9, %10 : vector<16x4xi32>
    %12 = vector.broadcast %4 : vector<16x1xi32> to vector<16x4xi32>
    %13 = arith.cmpi eq, %9, %12 : vector<16x4xi32>
    %14 = arith.andi %13, %11 : vector<16x4xi1>
    %cst = arith.constant 0xFF800000 : f32
    %15 = vector.broadcast %cst : f32 to vector<16x4xf32>
    %16 = arith.select %11, %3, %15 : vector<16x4xi1>, vector<16x4xf32>
    %c0_7 = arith.constant 0 : index
    %c0_8 = arith.constant 0 : index
    %17 = vector.load %arg6[%c0_7, %c0_8] : memref<16x1xf32, #tpu.memory_space<vmem>>, vector<16x1xf32>
    %cst_9 = arith.constant dense<0xFF800000> : vector<16xf32>
    %18 = vector.multi_reduction <maximumf>, %16, %cst_9 [1] : vector<16x4xf32> to vector<16xf32>
    %19 = vector.shape_cast %18 : vector<16xf32> to vector<16x1xf32>
    %20 = arith.maximumf %17, %19 : vector<16x1xf32>
    %c0_10 = arith.constant 0 : index
    %c0_11 = arith.constant 0 : index
    %21 = vector.load %arg7[%c0_10, %c0_11] : memref<16x1xf32, #tpu.memory_space<vmem>>, vector<16x1xf32>
    %22 = arith.subf %17, %20 : vector<16x1xf32>
    %23 = math.exp %22 : vector<16x1xf32>
    %24 = arith.mulf %21, %23 : vector<16x1xf32>
    %25 = vector.broadcast %20 : vector<16x1xf32> to vector<16x4xf32>
    %26 = arith.subf %16, %25 : vector<16x4xf32>
    %27 = math.exp %26 : vector<16x4xf32>
    %cst_12 = arith.constant dense<0.000000e+00> : vector<16xf32>
    %28 = vector.multi_reduction <add>, %27, %cst_12 [1] : vector<16x4xf32> to vector<16xf32>
    %29 = vector.shape_cast %28 : vector<16xf32> to vector<16x1xf32>
    %30 = arith.addf %24, %29 : vector<16x1xf32>
    %c0_13 = arith.constant 0 : index
    %c0_14 = arith.constant 0 : index
    %31 = vector.load %arg7[%c0_13, %c0_14] : memref<16x1xf32, #tpu.memory_space<vmem>>, vector<16x1xf32>
    tpu.vector_store %arg7[%c0_13, %c0_14], %30 {strides = array<i32>} : memref<16x1xf32, #tpu.memory_space<vmem>>, vector<16x1xf32>,
    %c0_15 = arith.constant 0 : index
    %c0_16 = arith.constant 0 : index
    %32 = vector.load %arg6[%c0_15, %c0_16] : memref<16x1xf32, #tpu.memory_space<vmem>>, vector<16x1xf32>
    tpu.vector_store %arg6[%c0_15, %c0_16], %20 {strides = array<i32>} : memref<16x1xf32, #tpu.memory_space<vmem>>, vector<16x1xf32>,
    %c0_17 = arith.constant 0 : index
    %c0_18 = arith.constant 0 : index
    %33 = vector.load %arg8[%c0_17, %c0_18] : memref<16x1xf32, #tpu.memory_space<vmem>>, vector<16x1xf32>
    %cst_19 = arith.constant 0.000000e+00 : f32
    %34 = vector.broadcast %cst_19 : f32 to vector<16x4xf32>
    %35 = arith.select %14, %3, %34 : vector<16x4xi1>, vector<16x4xf32>
    %cst_20 = arith.constant dense<0.000000e+00> : vector<16xf32>
    %36 = vector.multi_reduction <add>, %35, %cst_20 [1] : vector<16x4xf32> to vector<16xf32>
    %37 = vector.shape_cast %36 : vector<16xf32> to vector<16x1xf32>
    %38 = arith.addf %33, %37 : vector<16x1xf32>
    %c0_21 = arith.constant 0 : index
    %c0_22 = arith.constant 0 : index
    %39 = vector.load %arg8[%c0_21, %c0_22] : memref<16x1xf32, #tpu.memory_space<vmem>>, vector<16x1xf32>
    tpu.vector_store %arg8[%c0_21, %c0_22], %38 {strides = array<i32>} : memref<16x1xf32, #tpu.memory_space<vmem>>, vector<16x1xf32>,
    %c0_23 = arith.constant 0 : index
    %c0_24 = arith.constant 0 : index
    %40 = vector.load %arg9[%c0_23, %c0_24] : memref<16x1xf32, #tpu.memory_space<vmem>>, vector<16x1xf32>
    %cst_25 = arith.constant 0.000000e+00 : f32
    %41 = vector.shape_cast %5 : vector<1x4xf32> to vector<1x4xf32>
    %42 = vector.broadcast %41 : vector<1x4xf32> to vector<16x4xf32>
    %43 = vector.broadcast %cst_25 : f32 to vector<16x4xf32>
    %44 = arith.select %14, %42, %43 : vector<16x4xi1>, vector<16x4xf32>
    %cst_26 = arith.constant dense<0.000000e+00> : vector<16xf32>
    %45 = vector.multi_reduction <add>, %44, %cst_26 [1] : vector<16x4xf32> to vector<16xf32>
    %46 = vector.shape_cast %45 : vector<16xf32> to vector<16x1xf32>
    %47 = arith.addf %40, %46 : vector<16x1xf32>
    %c0_27 = arith.constant 0 : index
    %c0_28 = arith.constant 0 : index
    %48 = vector.load %arg9[%c0_27, %c0_28] : memref<16x1xf32, #tpu.memory_space<vmem>>, vector<16x1xf32>
    tpu.vector_store %arg9[%c0_27, %c0_28], %47 {strides = array<i32>} : memref<16x1xf32, #tpu.memory_space<vmem>>, vector<16x1xf32>,
    %c0_i32_29 = arith.constant 0 : i32
    %49 = arith.cmpi eq, %arg1, %c0_i32_29 : i32
    %50 = arith.extui %49 : i1 to i32
    %c0_i32_30 = arith.constant 0 : i32
    %51 = arith.cmpi ne, %50, %c0_i32_30 : i32
    scf.if %51 {
      %c0_31 = arith.constant 0 : index
      %c0_32 = arith.constant 0 : index
      %52 = vector.load %arg6[%c0_31, %c0_32] : memref<16x1xf32, #tpu.memory_space<vmem>>, vector<16x1xf32>
      %c0_33 = arith.constant 0 : index
      %c0_34 = arith.constant 0 : index
      %53 = vector.load %arg7[%c0_33, %c0_34] : memref<16x1xf32, #tpu.memory_space<vmem>>, vector<16x1xf32>
      %54 = math.log %53 : vector<16x1xf32>
      %55 = arith.addf %52, %54 : vector<16x1xf32>
      %c0_35 = arith.constant 0 : index
      %c0_36 = arith.constant 0 : index
      %56 = vector.load %arg8[%c0_35, %c0_36] : memref<16x1xf32, #tpu.memory_space<vmem>>, vector<16x1xf32>
      %57 = arith.subf %55, %56 : vector<16x1xf32>
      %58 = tpu.iota {dimensions = array<i32: 0>} : vector<16x1xi32>
      %c16_i32 = arith.constant 16 : i32
      %59 = arith.muli %arg0, %c16_i32 : i32
      %60 = vector.broadcast %59 : i32 to vector<16x1xi32>
      %61 = arith.addi %58, %60 : vector<16x1xi32>
      %c10_i32 = arith.constant 10 : i32
      %62 = vector.broadcast %c10_i32 : i32 to vector<16x1xi32>
      %63 = arith.cmpi slt, %61, %62 : vector<16x1xi32>
      %cst_37 = arith.constant 0.000000e+00 : f32
      %64 = vector.broadcast %cst_37 : f32 to vector<16x1xf32>
      %65 = arith.select %63, %57, %64 : vector<16x1xi1>, vector<16x1xf32>
      %c0_38 = arith.constant 0 : index
      %c0_39 = arith.constant 0 : index
      %66 = vector.load %arg9[%c0_38, %c0_39] : memref<16x1xf32, #tpu.memory_space<vmem>>, vector<16x1xf32>
      %cst_40 = arith.constant 0.000000e+00 : f32
      %67 = vector.broadcast %cst_40 : f32 to vector<16x1xf32>
      %68 = arith.select %63, %66, %67 : vector<16x1xi1>, vector<16x1xf32>
      %69 = arith.mulf %68, %65 : vector<16x1xf32>
      %cst_41 = arith.constant 0.000000e+00 : f32
      %70 = vector.broadcast %cst_41 : f32 to vector<16x1xf32>
      %71 = arith.subf %70, %65 : vector<16x1xf32>
      %72 = math.exp %71 : vector<16x1xf32>
      %cst_42 = arith.constant 1.000000e+00 : f32
      %73 = vector.broadcast %cst_42 : f32 to vector<16x1xf32>
      %74 = arith.subf %73, %72 : vector<16x1xf32>
      %75 = arith.mulf %74, %74 : vector<16x1xf32>
      %76 = arith.mulf %75, %69 : vector<16x1xf32>
      %77 = vector.shape_cast %69 : vector<16x1xf32> to vector<1x16x1xf32>
      %cst_43 = arith.constant dense<0.000000e+00> : vector<1xf32>
      %78 = vector.multi_reduction <add>, %77, %cst_43 [1, 2] : vector<1x16x1xf32> to vector<1xf32>
      %79 = vector.shape_cast %78 : vector<1xf32> to vector<1x1x1xf32>
      %80 = vector.extract %79[0, 0, 0] : f32 from vector<1x1x1xf32>
      %c0_44 = arith.constant 0 : index
      %c0_45 = arith.constant 0 : index
      %81 = memref.load %arg5[%c0_44, %c0_45] : memref<1x3xf32, #tpu.memory_space<smem>>
      memref.store %80, %arg5[%c0_44, %c0_45] : memref<1x3xf32, #tpu.memory_space<smem>>
      %82 = vector.shape_cast %68 : vector<16x1xf32> to vector<1x16x1xf32>
      %cst_46 = arith.constant dense<0.000000e+00> : vector<1xf32>
      %83 = vector.multi_reduction <add>, %82, %cst_46 [1, 2] : vector<1x16x1xf32> to vector<1xf32>
      %84 = vector.shape_cast %83 : vector<1xf32> to vector<1x1x1xf32>
      %85 = vector.extract %84[0, 0, 0] : f32 from vector<1x1x1xf32>
      %c0_47 = arith.constant 0 : index
      %c1 = arith.constant 1 : index
      %86 = memref.load %arg5[%c0_47, %c1] : memref<1x3xf32, #tpu.memory_space<smem>>
      memref.store %85, %arg5[%c0_47, %c1] : memref<1x3xf32, #tpu.memory_space<smem>>
      %87 = vector.shape_cast %76 : vector<16x1xf32> to vector<1x16x1xf32>
      %cst_48 = arith.constant dense<0.000000e+00> : vector<1xf32>
      %88 = vector.multi_reduction <add>, %87, %cst_48 [1, 2] : vector<1x16x1xf32> to vector<1xf32>
      %89 = vector.shape_cast %88 : vector<1xf32> to vector<1x1x1xf32>
      %90 = vector.extract %89[0, 0, 0] : f32 from vector<1x1x1xf32>
      %c0_49 = arith.constant 0 : index
      %c2 = arith.constant 2 : index
      %91 = memref.load %arg5[%c0_49, %c2] : memref<1x3xf32, #tpu.memory_space<smem>>
      memref.store %90, %arg5[%c0_49, %c2] : memref<1x3xf32, #tpu.memory_space<smem>>
    } else {
    }
    return
  }
  func.func @transform_0(%arg0: i32, %arg1: i32) -> (i32, i32) {
    %c0_i32 = arith.constant 0 : i32
    return %arg0, %arg1 : i32, i32
  }
  func.func @transform_1(%arg0: i32, %arg1: i32) -> (i32, i32) {
    %c0_i32 = arith.constant 0 : i32
    %c0_i32_0 = arith.constant 0 : i32
    return %arg0, %c0_i32 : i32, i32
  }
  func.func @transform_2(%arg0: i32, %arg1: i32) -> (i32, i32) {
    %c0_i32 = arith.constant 0 : i32
    %c0_i32_0 = arith.constant 0 : i32
    return %c0_i32, %arg1 : i32, i32
  }
  func.func @transform_3(%arg0: i32, %arg1: i32) -> (i32, i32) {
    %c0_i32 = arith.constant 0 : i32
    %c0_i32_0 = arith.constant 0 : i32
    return %arg0, %c0_i32 : i32, i32
  }
}

</mosaic_0001>

<llo_original>
// kernel: tpu_custom_call.1
$region0: #{tpu_custom_call.1}
  #allocation0 [shape = 'u32[]', space=smem, size = 0x4, offset = 0x4, fixed_abs, tag = 'smem constant byte address 0x4 - core index']
  #allocation1 [shape = 'u32[72,128]{1,0:T(1,128)}', space=vmem, size = 0x9000, scoped, tag = 'internal scratch']
  #allocation2 [shape = 'f32[16,1]{1,0:T(8,128)}', space=vmem, size = 0x2000, scoped, tag = 'scratch operand']
  #allocation3 [shape = 'f32[16,1]{1,0:T(8,128)}', space=vmem, size = 0x2000, scoped, tag = 'scratch operand']
  #allocation4 [shape = 'f32[16,1]{1,0:T(8,128)}', space=vmem, size = 0x2000, scoped, tag = 'scratch operand']
  #allocation5 [shape = 'f32[16,1]{1,0:T(8,128)}', space=vmem, size = 0x2000, scoped, tag = 'scratch operand']
  %s0 = inlined_call_operand.vmem [shape: f32[10,4], index: 0, kind: input, shape index: {}]
  %s1 = inlined_call_operand.vmem [shape: s32[10,1], index: 1, kind: input, shape index: {}]
  %s2 = inlined_call_operand.vmem [shape: f32[1,4], index: 2, kind: input, shape index: {}]
  %s3 = inlined_call_operand.hbm [shape: f32[1,3], index: 3, kind: output, shape index: {}]
  %s4 = sld [smem:[#allocation0]]
  $region30: #{tpu_custom_call.1} parent=0
    _
  %s6 = ssub.s32 1, %s4
  %s7 = scalar_select 0, %s6, %s4
  $region1: #{tpu_custom_call.1} parent=0
    #allocation6 [shape = 'u8[512]{0}', space=smem, size = 0x200, scoped, tag = 'output window, operand 0, single buffered']
    #allocation7 [shape = 's32[1]{0}', space=sflag, size = 0x4, scoped, tag = 'scoped memory for tpu_custom_call.1']
    %8 = vsyncpa [#allocation7], 0
    // Predicated region
    $region2: #{tpu_custom_call.1} parent=1 // pred_check
      _
    $region3: #{tpu_custom_call.1} parent=1 // pred_check_branch
      %10 = sbr.rel (0) target = $region5
    $region4: #{tpu_custom_call.1} parent=1 // pred_region
      _
    $region5: #{tpu_custom_call.1} parent=1 // pred_fallthru
      _
    // Predicated region
    $region6: #{tpu_custom_call.1} parent=1 // pred_check
      _
    $region7: #{tpu_custom_call.1} parent=1 // pred_check_branch
      %12 = sbr.rel (0) target = $region9
    $region8: #{tpu_custom_call.1} parent=1 // pred_region
      _
    $region9: #{tpu_custom_call.1} parent=1 // pred_fallthru
      _
    // Predicated region
    $region10: #{tpu_custom_call.1} parent=1 // pred_check
      _
    $region11: #{tpu_custom_call.1} parent=1 // pred_check_branch
      %14 = sbr.rel (0) target = $region13
    $region12: #{tpu_custom_call.1} parent=1 // pred_region
      _
    $region13: #{tpu_custom_call.1} parent=1 // pred_fallthru
      _
    %p15 = scmp.eq.s32.totalorder 0, 0
    // Predicated region
    $region14: #{tpu_custom_call.1} parent=1 // pred_check
      %p16 = pneg %p15
    $region15: #{tpu_custom_call.1} parent=1 // pred_check_branch
      %18 = sbr.rel (%p16) target = $region17
    $region16: #{tpu_custom_call.1} parent=1 // pred_region
      %vm19 = vcmask 7168
      %20 = vst.msk [vmem:[#allocation2] sm:$0xff] %vm19, -inf
      %21 = vst.msk [vmem:[#allocation2 + $0x8] sm:$0xff] %vm19, -inf
      %22 = vst.msk [vmem:[#allocation3] sm:$0xff] %vm19, 0.0
      %23 = vst.msk [vmem:[#allocation3 + $0x8] sm:$0xff] %vm19, 0.0
      %24 = vst.msk [vmem:[#allocation4] sm:$0xff] %vm19, 0.0
      %25 = vst.msk [vmem:[#allocation4 + $0x8] sm:$0xff] %vm19, 0.0
      %26 = vst.msk [vmem:[#allocation5] sm:$0xff] %vm19, 0.0
      %27 = vst.msk [vmem:[#allocation5 + $0x8] sm:$0xff] %vm19, 0.0
    $region17: #{tpu_custom_call.1} parent=1 // pred_fallthru
      _
    %v28 = vld [vmem:[%s0] sm:$0xff]
    %v29 = vld [vmem:[%s0 + $0x8] sm:$0xff]
    %v30 = vld [vmem:[%s1] sm:$0xff]
    %v31 = vld [vmem:[%s1 + $0x8] sm:$0xff]
    %v32 = vld [vmem:[%s2] sm:$0x1]
    %v33 = vlaneseq
    %v34 = vand.u32 %v33, 127
    %s35 = smul.u32 0, 4
    %v36 = vstv %s35
    %v37 = vadd.s32 %v34, %v36
    %vm38 = vcmp.lt.s32.totalorder %v37, 4
    %39 = vset.pattern.permute.xlu0 0
    %40 = vperm.xlu0 %39, %v30
    %v41 = vpop.permute.xlu0 %40
    %42 = vset.pattern.permute.xlu0 0
    %43 = vperm.xlu0 %42, %v31
    %v44 = vpop.permute.xlu0 %43
    %vm45 = vcmp.eq.s32.totalorder %v37, %v41
    %vm46 = vcmp.eq.s32.totalorder %v37, %v44
    %vm47 = vmand %vm45, %vm38
    %vm48 = vmand %vm46, %vm38
    %v49 = vsel %vm38, %v28, -inf
    %v50 = vsel %vm38, %v29, -inf
    %v51 = vld [vmem:[#allocation2] sm:$0xff]
    %v52 = vld [vmem:[#allocation2 + $0x8] sm:$0xff]
    %vm53 = vcmask 31744
    %v54 = vsel %vm53, %v49, -inf
    %55 = vmax.xlane.f32.xlu0 %v54
    %v56 = vpop.xlane.xlu0 %55
    %v57 = vsel %vm53, %v50, -inf
    %58 = vmax.xlane.f32.xlu0 %v57
    %v59 = vpop.xlane.xlu0 %58
    %v60 = vmax.f32 %v51, %v56
    %v61 = vmax.f32 %v52, %v59
    %v62 = vld [vmem:[#allocation3] sm:$0xff]
    %v63 = vld [vmem:[#allocation3 + $0x8] sm:$0xff]
    %v64 = vsub.f32 %v51, %v60
    %v65 = vsub.f32 %v52, %v61
    %v66 = vmul.f32 %v64, 1.442695
    %v67 = vpow.pop %v66
    %v68 = vmul.f32 %v65, 1.442695
    %v69 = vpow.pop %v68
    %v70 = vmul.f32 %v62, %v67
    %v71 = vmul.f32 %v63, %v69
    %73 = vset.pattern.permute.xlu0 0
    %74 = vperm.xlu0 %73, %v60
    %v75 = vpop.permute.xlu0 %74
    %78 = vset.pattern.permute.xlu0 0
    %79 = vperm.xlu0 %78, %v61
    %v80 = vpop.permute.xlu0 %79
    %v82 = vsub.f32 %v49, %v75
    %v83 = vsub.f32 %v50, %v80
    %v84 = vmul.f32 %v82, 1.442695
    %v85 = vpow.pop %v84
    %v86 = vmul.f32 %v83, 1.442695
    %v87 = vpow.pop %v86
    %v88 = vsel %vm53, %v85, 0.0
    %89 = vadd.xlane.f32.xlu0 %v88
    %v90 = vpop.xlane.xlu0 %89
    %v91 = vsel %vm53, %v87, 0.0
    %92 = vadd.xlane.f32.xlu0 %v91
    %v93 = vpop.xlane.xlu0 %92
    %v94 = vadd.f32 %v70, %v90
    %v95 = vadd.f32 %v71, %v93
    %vm96 = vcmask 7168
    %97 = vst.msk [vmem:[#allocation3] sm:$0xff] %vm96, %v94
    %98 = vst.msk [vmem:[#allocation3 + $0x8] sm:$0xff] %vm96, %v95
    %99 = vst.msk [vmem:[#allocation2] sm:$0xff] %vm96, %v60
    %100 = vst.msk [vmem:[#allocation2 + $0x8] sm:$0xff] %vm96, %v61
    %v101 = vld [vmem:[#allocation4] sm:$0xff]
    %v102 = vld [vmem:[#allocation4 + $0x8] sm:$0xff]
    %v103 = vsel %vm47, %v28, 0.0
    %v104 = vsel %vm48, %v29, 0.0
    %v105 = vsel %vm53, %v103, 0.0
    %106 = vadd.xlane.f32.xlu0 %v105
    %v107 = vpop.xlane.xlu0 %106
    %v108 = vsel %vm53, %v104, 0.0
    %109 = vadd.xlane.f32.xlu0 %v108
    %v110 = vpop.xlane.xlu0 %109
    %v111 = vadd.f32 %v101, %v107
    %v112 = vadd.f32 %v102, %v110
    %113 = vst.msk [vmem:[#allocation4] sm:$0xff] %vm96, %v111
    %114 = vst.msk [vmem:[#allocation4 + $0x8] sm:$0xff] %vm96, %v112
    %v115 = vld [vmem:[#allocation5] sm:$0xff]
    %v116 = vld [vmem:[#allocation5 + $0x8] sm:$0xff]
    %v118 = vperm.slane %v32, 0
    %v120 = vsel %vm47, %v118, 0.0
    %v121 = vsel %vm48, %v118, 0.0
    %v122 = vsel %vm53, %v120, 0.0
    %123 = vadd.xlane.f32.xlu0 %v122
    %v124 = vpop.xlane.xlu0 %123
    %v125 = vsel %vm53, %v121, 0.0
    %126 = vadd.xlane.f32.xlu0 %v125
    %v127 = vpop.xlane.xlu0 %126
    %v128 = vadd.f32 %v115, %v124
    %v129 = vadd.f32 %v116, %v127
    %130 = vst.msk [vmem:[#allocation5] sm:$0xff] %vm96, %v128
    %131 = vst.msk [vmem:[#allocation5 + $0x8] sm:$0xff] %vm96, %v129
    // Predicated region
    $region18: #{tpu_custom_call.1} parent=1 // pred_check
      %p132 = pneg %p15
    $region19: #{tpu_custom_call.1} parent=1 // pred_check_branch
      %134 = sbr.rel (%p132) target = $region21
    $region20: #{tpu_custom_call.1} parent=1 // pred_region
      %v135 = vld [vmem:[#allocation2] sm:$0xff]
      %v136 = vld [vmem:[#allocation2 + $0x8] sm:$0xff]
      %v137 = vld [vmem:[#allocation3] sm:$0xff]
      %v138 = vld [vmem:[#allocation3 + $0x8] sm:$0xff]
      %v139 = vlog2.pop %v137
      %v140 = vmul.f32 %v139, 0.6931472
      %v141 = vlog2.pop %v138
      %v142 = vmul.f32 %v141, 0.6931472
      %v143 = vadd.f32 %v135, %v140
      %v144 = vadd.f32 %v136, %v142
      %v145 = vld [vmem:[#allocation4] sm:$0xff]
      %v146 = vld [vmem:[#allocation4 + $0x8] sm:$0xff]
      %v147 = vsub.f32 %v143, %v145
      %v148 = vsub.f32 %v144, %v146
      %v149 = vlaneseq
      %v150 = vshrl.u32 %v149, 7
      %v151 = vadd.s32 %v150, 8
      %s152 = smul.u32 0, 16
      %v153 = vstv %s152
      %v154 = vadd.s32 %v150, %v153
      %v155 = vadd.s32 %v151, %v153
      %vm156 = vcmp.lt.s32.totalorder %v154, 10
      %vm157 = vcmp.lt.s32.totalorder %v155, 10
      %v158 = vsel %vm156, %v147, 0.0
      %v159 = vsel %vm157, %v148, 0.0
      %v160 = vld [vmem:[#allocation5] sm:$0xff]
      %v161 = vld [vmem:[#allocation5 + $0x8] sm:$0xff]
      %v162 = vsel %vm156, %v160, 0.0
      %v163 = vsel %vm157, %v161, 0.0
      %v164 = vmul.f32 %v162, %v158
      %v165 = vmul.f32 %v163, %v159
      %v166 = vsub.f32 0.0, %v158
      %v167 = vsub.f32 0.0, %v159
      %v168 = vmul.f32 %v166, 1.442695
      %v169 = vpow.pop %v168
      %v170 = vmul.f32 %v167, 1.442695
      %v171 = vpow.pop %v170
      %v172 = vsub.f32 1.0, %v169
      %v173 = vsub.f32 1.0, %v171
      %v174 = vmul.f32 %v172, %v172
      %v175 = vmul.f32 %v173, %v173
      %v176 = vmul.f32 %v174, %v164
      %v177 = vmul.f32 %v175, %v165
      %v178 = vsel %vm96, %v164, 0.0
      %v179 = vsel %vm96, %v165, 0.0
      %v180 = vadd.f32 %v178, %v179
      %181 = vadd.xlane.f32.xlu0 %v180
      %v182 = vpop.xlane.xlu0 %181
      %v183 = vrot.slane %v182, 4
      %v184 = vadd.f32 %v182, %v183
      %v185 = vrot.slane %v184, 2
      %v186 = vadd.f32 %v184, %v185
      %v187 = vrot.slane %v186, 1
      %v188 = vadd.f32 %v186, %v187
      %s189 = vtos %v188
      %s190 = scalar_lea.smem [#allocation6], 0
      %191 = sst [smem:[%s190]] %s189
      %v192 = vsel %vm96, %v162, 0.0
      %v193 = vsel %vm96, %v163, 0.0
      %v194 = vadd.f32 %v192, %v193
      %195 = vadd.xlane.f32.xlu0 %v194
      %v196 = vpop.xlane.xlu0 %195
      %v197 = vrot.slane %v196, 4
      %v198 = vadd.f32 %v196, %v197
      %v199 = vrot.slane %v198, 2
      %v200 = vadd.f32 %v198, %v199
      %v201 = vrot.slane %v200, 1
      %v202 = vadd.f32 %v200, %v201
      %s203 = vtos %v202
      %s204 = scalar_lea.smem [#allocation6], 1
      %205 = sst [smem:[%s204]] %s203
      %v206 = vsel %vm96, %v176, 0.0
      %v207 = vsel %vm96, %v177, 0.0
      %v208 = vadd.f32 %v206, %v207
      %209 = vadd.xlane.f32.xlu0 %v208
      %v210 = vpop.xlane.xlu0 %209
      %v211 = vrot.slane %v210, 4
      %v212 = vadd.f32 %v210, %v211
      %v213 = vrot.slane %v212, 2
      %v214 = vadd.f32 %v212, %v213
      %v215 = vrot.slane %v214, 1
      %v216 = vadd.f32 %v214, %v215
      %s217 = vtos %v216
      %s218 = scalar_lea.smem [#allocation6], 2
      %219 = sst [smem:[%s218]] %s217
    $region21: #{tpu_custom_call.1} parent=1 // pred_fallthru
      _
    // Predicated region
    $region22: #{tpu_custom_call.1} parent=1 // pred_check
      _
    $region23: #{tpu_custom_call.1} parent=1 // pred_check_branch
      %221 = sbr.rel (0) target = $region25
    $region24: #{tpu_custom_call.1} parent=1 // pred_region
      %223 = vsyncadd [#allocation7], 0
      %s225 = sshll.u32 %s3, 4
      %s226 = int_to_ptr.hbm [resolvable:$true] %s225
      %228 = dma.smem_to_hbm [#allocation6], 16, %s226, [#allocation7]
    $region25: #{tpu_custom_call.1} parent=1 // pred_fallthru
      _
    // Predicated region
    $region26: #{tpu_custom_call.1} parent=1 // pred_check
      _
    $region27: #{tpu_custom_call.1} parent=1 // pred_check_branch
      %230 = sbr.rel (0) target = $region29
    $region28: #{tpu_custom_call.1} parent=1 // pred_region
      %232 = dma.done [#allocation7], 16
    $region29: #{tpu_custom_call.1} parent=1 // pred_fallthru
      _
    %233 = sfence
    %234 = vsyncpa [#allocation7], 1

</llo_original>
